<compile_context>
chip_gen: v6e
topology: v6e:2x2x1
jax: 0.10.0
libtpu: 0.0.40
codegen_flags: <defaults>
</compile_context>

<pallas_src>
import jax
import jax.numpy as jnp
from jax.experimental import pallas as pl
from jax.experimental.pallas import tpu as pltpu

LANE_PAD = 128  # lane-dense feature width


def fused_gin_kernel(a_ref, x_ref, w_ref, b_ref, eps_ref, o_ref):
    """All GIN layers fused; adjacency resident in VMEM for the whole kernel.

    a_ref   : (N, N)        bf16 adjacency (A[dst, src] = #edges src->dst)
    x_ref   : (N, 128)      f32 zero-padded input features
    w_ref   : (L, 128, 128) f32 zero-padded stacked layer weights
    b_ref   : (L, 1, 128)   f32 zero-padded stacked biases
    eps_ref : (L,)          f32 per-layer eps (SMEM)
    o_ref   : (N, 128)      f32 zero-padded output features
    """
    # Widen bf16 adjacency to f32 once (cheap VPU cast); keeps all matmuls f32.
    a = a_ref[...].astype(jnp.float32)
    h = x_ref[...]
    num_layers = w_ref.shape[0]
    # Static unroll over the (few) layers; per-layer weight slices are static.
    for l in range(num_layers):
        # GIN MLP linear first:  Y = X @ W   (MXU, f32 accumulate)
        y = jnp.dot(h, w_ref[l], preferred_element_type=jnp.float32)
        # Aggregation + self term (exact reorder of ((1+eps)x + A@x) @ W):
        #   Z = A @ Y + (1+eps) * Y + b
        z = (
            jnp.dot(a, y, preferred_element_type=jnp.float32)
            + (1.0 + eps_ref[l]) * y
            + b_ref[l]
        )
        # GIN MLP ReLU (outer self.activation ReLU is idempotent on top of it).
        h = jnp.maximum(z, 0.0)
    o_ref[...] = h.astype(o_ref.dtype)


def fused_gin_forward(adj_bf16, x_pad, w_stack, b_stack, eps_stack):
    n = x_pad.shape[0]
    return pl.pallas_call(
        fused_gin_kernel,
        out_shape=jax.ShapeDtypeStruct((n, LANE_PAD), jnp.float32),
        in_specs=[
            pl.BlockSpec(memory_space=pltpu.MemorySpace.VMEM),   # adjacency (N, N) bf16
            pl.BlockSpec(memory_space=pltpu.MemorySpace.VMEM),   # features  (N, 128)
            pl.BlockSpec(memory_space=pltpu.MemorySpace.VMEM),   # weights   (L, 128, 128)
            pl.BlockSpec(memory_space=pltpu.MemorySpace.VMEM),   # biases    (L, 1, 128)
            pl.BlockSpec(memory_space=pltpu.MemorySpace.SMEM),   # eps       (L,)
        ],
        out_specs=pl.BlockSpec(memory_space=pltpu.MemorySpace.VMEM),
    )(adj_bf16, x_pad, w_stack, b_stack, eps_stack)


def init_params(key, input_dim, hidden_dim, out_dim, num_layers):
    """Deterministic per-layer (W, b, eps) matching the module's Linear shapes."""
    dims = [input_dim] + [hidden_dim] * (num_layers - 1) + [out_dim]
    params = []
    for l in range(num_layers):
        f_in, f_out = dims[l], dims[l + 1]
        key, kw, kb = jax.random.split(key, 3)
        w = jax.random.normal(kw, (f_in, f_out), jnp.float32) * (1.0 / jnp.sqrt(f_in))
        b = jax.random.normal(kb, (f_out,), jnp.float32) * 0.01
        eps = jnp.zeros((), jnp.float32)  # train_eps=True -> initialized to 0
        params.append((w, b, eps))
    return params


def gnn_forward(in_feat, edge_index, params):
    """Forward pass of GNNModel (GINConv, no residual, no layer_norm, eval dropout)."""
    n, f_in = in_feat.shape
    num_layers = len(params)
    f_out_final = params[-1][0].shape[1]

    # Densify edge_index -> adjacency with A[dst, src] += 1 (glue, plain JAX).
    # Edge multiplicities are small integers => exact in bf16 (halves HBM DMA).
    src, dst = edge_index[0], edge_index[1]
    adj = jnp.zeros((n, n), jnp.float32).at[dst, src].add(1.0).astype(jnp.bfloat16)

    # Lane-dense zero padding: features to (N, 128), weights to (L, 128, 128),
    # bias to (L, 1, 128).  Zero padding is exactly preserved by every layer.
    x_pad = jnp.zeros((n, LANE_PAD), jnp.float32).at[:, :f_in].set(in_feat)
    w_stack = jnp.zeros((num_layers, LANE_PAD, LANE_PAD), jnp.float32)
    b_stack = jnp.zeros((num_layers, 1, LANE_PAD), jnp.float32)
    eps_stack = jnp.zeros((num_layers,), jnp.float32)
    for l, (w, b, eps) in enumerate(params):
        fi, fo = w.shape
        w_stack = w_stack.at[l, :fi, :fo].set(w)
        b_stack = b_stack.at[l, 0, :fo].set(b)
        eps_stack = eps_stack.at[l].set(eps)

    out_pad = fused_gin_forward(adj, x_pad, w_stack, b_stack, eps_stack)
    return out_pad[:, :f_out_final]


if __name__ == "__main__":
    # Small deterministic problem: 32 nodes, 64 edges, 16 -> 32 -> 32 -> 8.
    N, E = 32, 64
    INPUT_DIM, HIDDEN_DIM, OUT_DIM, NUM_LAYERS = 16, 32, 8, 3

    key = jax.random.PRNGKey(0)
    k_feat, k_src, k_dst, k_params = jax.random.split(key, 4)

    in_feat = jax.random.normal(k_feat, (N, INPUT_DIM), jnp.float32)
    edge_index = jnp.stack(
        [
            jax.random.randint(k_src, (E,), 0, N),
            jax.random.randint(k_dst, (E,), 0, N),
        ],
        axis=0,
    ).astype(jnp.int32)

    params = init_params(k_params, INPUT_DIM, HIDDEN_DIM, OUT_DIM, NUM_LAYERS)

    out = gnn_forward(in_feat, edge_index, params)
    jax.block_until_ready(out)
    assert out.shape == (N, OUT_DIM), out.shape
    print("KERNEL_OK")
</pallas_src>

<mosaic_0001>
module attributes {stable_mosaic.version = 11 : i64} {
  func.func @fused_gin_kernel(%arg0: memref<32x32xbf16, #tpu.memory_space<vmem>>, %arg1: memref<32x128xf32, #tpu.memory_space<vmem>>, %arg2: memref<3x128x128xf32, #tpu.memory_space<vmem>>, %arg3: memref<3x1x128xf32, #tpu.memory_space<vmem>>, %arg4: memref<3xf32, #tpu.memory_space<smem>>, %arg5: memref<32x128xf32, #tpu.memory_space<vmem>>) attributes {dimension_semantics = [], scalar_prefetch = 0 : i64, scratch_operands = 0 : i64, tpu.core_type = #tpu.core_type<tc>} {
    %c0 = arith.constant 0 : index
    %c0_0 = arith.constant 0 : index
    %0 = vector.load %arg0[%c0, %c0_0] : memref<32x32xbf16, #tpu.memory_space<vmem>>, vector<32x32xbf16>
    %1 = arith.extf %0 : vector<32x32xbf16> to vector<32x32xf32>
    %c0_1 = arith.constant 0 : index
    %c0_2 = arith.constant 0 : index
    %2 = vector.load %arg1[%c0_1, %c0_2] : memref<32x128xf32, #tpu.memory_space<vmem>>, vector<32x128xf32>
    %c0_3 = arith.constant 0 : index
    %c0_4 = arith.constant 0 : index
    %c0_5 = arith.constant 0 : index
    %3 = vector.load %arg2[%c0_3, %c0_4, %c0_5] : memref<3x128x128xf32, #tpu.memory_space<vmem>>, vector<1x128x128xf32>
    %4 = vector.shape_cast %3 : vector<1x128x128xf32> to vector<128x128xf32>
    %cst = arith.constant dense<0.000000e+00> : vector<32x128xf32>
    %5 = tpu.matmul %2, %4, %cst {dimension_numbers = #tpu.dot_dimension_numbers<[1], [0], [0], [1], [0, 0, 1, 1], [], []>} : vector<32x128xf32>, vector<128x128xf32>, vector<32x128xf32> -> vector<32x128xf32>
    %cst_6 = arith.constant dense<0.000000e+00> : vector<32x128xf32>
    %6 = tpu.matmul %1, %5, %cst_6 {dimension_numbers = #tpu.dot_dimension_numbers<[1], [0], [0], [1], [0, 0, 1, 1], [], []>} : vector<32x32xf32>, vector<32x128xf32>, vector<32x128xf32> -> vector<32x128xf32>
    %c0_7 = arith.constant 0 : index
    %7 = memref.load %arg4[%c0_7] : memref<3xf32, #tpu.memory_space<smem>>
    %cst_8 = arith.constant 1.000000e+00 : f32
    %8 = arith.addf %cst_8, %7 : f32
    %9 = vector.broadcast %8 : f32 to vector<32x128xf32>
    %10 = arith.mulf %9, %5 : vector<32x128xf32>
    %11 = arith.addf %6, %10 : vector<32x128xf32>
    %c0_9 = arith.constant 0 : index
    %c0_10 = arith.constant 0 : index
    %c0_11 = arith.constant 0 : index
    %12 = vector.load %arg3[%c0_9, %c0_10, %c0_11] : memref<3x1x128xf32, #tpu.memory_space<vmem>>, vector<1x1x128xf32>
    %13 = vector.shape_cast %12 : vector<1x1x128xf32> to vector<1x128xf32>
    %14 = vector.broadcast %13 : vector<1x128xf32> to vector<32x128xf32>
    %15 = arith.addf %11, %14 : vector<32x128xf32>
    %cst_12 = arith.constant 0.000000e+00 : f32
    %16 = vector.broadcast %cst_12 : f32 to vector<32x128xf32>
    %17 = arith.maximumf %15, %16 : vector<32x128xf32>
    %c1 = arith.constant 1 : index
    %c0_13 = arith.constant 0 : index
    %c0_14 = arith.constant 0 : index
    %18 = vector.load %arg2[%c1, %c0_13, %c0_14] : memref<3x128x128xf32, #tpu.memory_space<vmem>>, vector<1x128x128xf32>
    %19 = vector.shape_cast %18 : vector<1x128x128xf32> to vector<128x128xf32>
    %cst_15 = arith.constant dense<0.000000e+00> : vector<32x128xf32>
    %20 = tpu.matmul %17, %19, %cst_15 {dimension_numbers = #tpu.dot_dimension_numbers<[1], [0], [0], [1], [0, 0, 1, 1], [], []>} : vector<32x128xf32>, vector<128x128xf32>, vector<32x128xf32> -> vector<32x128xf32>
    %cst_16 = arith.constant dense<0.000000e+00> : vector<32x128xf32>
    %21 = tpu.matmul %1, %20, %cst_16 {dimension_numbers = #tpu.dot_dimension_numbers<[1], [0], [0], [1], [0, 0, 1, 1], [], []>} : vector<32x32xf32>, vector<32x128xf32>, vector<32x128xf32> -> vector<32x128xf32>
    %c1_17 = arith.constant 1 : index
    %22 = memref.load %arg4[%c1_17] : memref<3xf32, #tpu.memory_space<smem>>
    %cst_18 = arith.constant 1.000000e+00 : f32
    %23 = arith.addf %cst_18, %22 : f32
    %24 = vector.broadcast %23 : f32 to vector<32x128xf32>
    %25 = arith.mulf %24, %20 : vector<32x128xf32>
    %26 = arith.addf %21, %25 : vector<32x128xf32>
    %c1_19 = arith.constant 1 : index
    %c0_20 = arith.constant 0 : index
    %c0_21 = arith.constant 0 : index
    %27 = vector.load %arg3[%c1_19, %c0_20, %c0_21] : memref<3x1x128xf32, #tpu.memory_space<vmem>>, vector<1x1x128xf32>
    %28 = vector.shape_cast %27 : vector<1x1x128xf32> to vector<1x128xf32>
    %29 = vector.broadcast %28 : vector<1x128xf32> to vector<32x128xf32>
    %30 = arith.addf %26, %29 : vector<32x128xf32>
    %cst_22 = arith.constant 0.000000e+00 : f32
    %31 = vector.broadcast %cst_22 : f32 to vector<32x128xf32>
    %32 = arith.maximumf %30, %31 : vector<32x128xf32>
    %c2 = arith.constant 2 : index
    %c0_23 = arith.constant 0 : index
    %c0_24 = arith.constant 0 : index
    %33 = vector.load %arg2[%c2, %c0_23, %c0_24] : memref<3x128x128xf32, #tpu.memory_space<vmem>>, vector<1x128x128xf32>
    %34 = vector.shape_cast %33 : vector<1x128x128xf32> to vector<128x128xf32>
    %cst_25 = arith.constant dense<0.000000e+00> : vector<32x128xf32>
    %35 = tpu.matmul %32, %34, %cst_25 {dimension_numbers = #tpu.dot_dimension_numbers<[1], [0], [0], [1], [0, 0, 1, 1], [], []>} : vector<32x128xf32>, vector<128x128xf32>, vector<32x128xf32> -> vector<32x128xf32>
    %cst_26 = arith.constant dense<0.000000e+00> : vector<32x128xf32>
    %36 = tpu.matmul %1, %35, %cst_26 {dimension_numbers = #tpu.dot_dimension_numbers<[1], [0], [0], [1], [0, 0, 1, 1], [], []>} : vector<32x32xf32>, vector<32x128xf32>, vector<32x128xf32> -> vector<32x128xf32>
    %c2_27 = arith.constant 2 : index
    %37 = memref.load %arg4[%c2_27] : memref<3xf32, #tpu.memory_space<smem>>
    %cst_28 = arith.constant 1.000000e+00 : f32
    %38 = arith.addf %cst_28, %37 : f32
    %39 = vector.broadcast %38 : f32 to vector<32x128xf32>
    %40 = arith.mulf %39, %35 : vector<32x128xf32>
    %41 = arith.addf %36, %40 : vector<32x128xf32>
    %c2_29 = arith.constant 2 : index
    %c0_30 = arith.constant 0 : index
    %c0_31 = arith.constant 0 : index
    %42 = vector.load %arg3[%c2_29, %c0_30, %c0_31] : memref<3x1x128xf32, #tpu.memory_space<vmem>>, vector<1x1x128xf32>
    %43 = vector.shape_cast %42 : vector<1x1x128xf32> to vector<1x128xf32>
    %44 = vector.broadcast %43 : vector<1x128xf32> to vector<32x128xf32>
    %45 = arith.addf %41, %44 : vector<32x128xf32>
    %cst_32 = arith.constant 0.000000e+00 : f32
    %46 = vector.broadcast %cst_32 : f32 to vector<32x128xf32>
    %47 = arith.maximumf %45, %46 : vector<32x128xf32>
    %c0_33 = arith.constant 0 : index
    %c0_34 = arith.constant 0 : index
    %48 = vector.load %arg5[%c0_33, %c0_34] : memref<32x128xf32, #tpu.memory_space<vmem>>, vector<32x128xf32>
    tpu.vector_store %arg5[%c0_33, %c0_34], %47 {strides = array<i32>} : memref<32x128xf32, #tpu.memory_space<vmem>>, vector<32x128xf32>,
    return
  }
}

</mosaic_0001>

<llo_original>
// kernel: tpu_custom_call.1
$region0: #{tpu_custom_call.1}
  #allocation0 [shape = 'u32[]', space=smem, size = 0x4, offset = 0x4, fixed_abs, tag = 'smem constant byte address 0x4 - core index']
  #allocation1 [shape = 'u32[144,128]{1,0:T(1,128)}', space=vmem, size = 0x12000, scoped, tag = 'internal scratch']
  %s0 = inlined_call_operand.hbm [shape: bf16[32,32], index: 0, kind: input, shape index: {}]
  %s1 = inlined_call_operand.hbm [shape: f32[32,128], index: 1, kind: input, shape index: {}]
  %s2 = inlined_call_operand.hbm [shape: f32[3,128,128], index: 2, kind: input, shape index: {}]
  %s3 = inlined_call_operand.vmem [shape: f32[3,1,128], index: 3, kind: input, shape index: {}]
  %s4 = inlined_call_operand.vmem [shape: f32[3], index: 4, kind: input, shape index: {}]
  %s5 = inlined_call_operand.hbm [shape: f32[32,128], index: 5, kind: output, shape index: {}]
  %s6 = sld [smem:[#allocation0]]
  $region46: #{tpu_custom_call.1} parent=0
    _
  %s8 = ssub.s32 1, %s6
  %s9 = scalar_select 0, %s8, %s6
  $region1: #{tpu_custom_call.1} parent=0
    #allocation2 [shape = 'u8[8192]{0}', space=vmem, size = 0x2000, scoped, tag = 'input window, operand 0, single buffered']
    #allocation3 [shape = 's32[1]{0}', space=sflag, size = 0x4, scoped, tag = 'scoped memory for tpu_custom_call.1']
    #allocation4 [shape = 's32[1]{0}', space=sflag, size = 0x4, scoped, tag = 'scoped memory for tpu_custom_call.1']
    #allocation5 [shape = 's32[1]{0}', space=sflag, size = 0x4, scoped, tag = 'scoped memory for tpu_custom_call.1']
    #allocation6 [shape = 'u8[16384]{0}', space=vmem, size = 0x4000, scoped, tag = 'input window, operand 1, single buffered']
    #allocation7 [shape = 's32[1]{0}', space=sflag, size = 0x4, scoped, tag = 'scoped memory for tpu_custom_call.1']
    #allocation8 [shape = 'u8[196608]{0}', space=vmem, size = 0x30000, scoped, tag = 'input window, operand 2, single buffered']
    #allocation9 [shape = 'u8[512]{0}', space=smem, size = 0x200, scoped, tag = 'input window, operand 4, single buffered']
    #allocation10 [shape = 'u8[16384]{0}', space=vmem, size = 0x4000, scoped, tag = 'output window, operand 0, single buffered']
    %10 = vsyncpa [#allocation3], 0
    %11 = vsyncpa [#allocation7], 0
    %12 = vsyncpa [#allocation5], 0
    %13 = vsyncpa [#allocation4], 0
    // Predicated region
    $region2: #{tpu_custom_call.1} parent=1 // pred_check
      _
    $region3: #{tpu_custom_call.1} parent=1 // pred_check_branch
      %15 = sbr.rel (0) target = $region5
    $region4: #{tpu_custom_call.1} parent=1 // pred_region
      %s17 = ssub.s32 256, 256
      %18 = vsyncadd [#allocation3], %s17
      %s19 = sshll.u32 [#allocation2], 4
      %s20 = int_to_ptr.vmem [resolvable:$true] %s19
      %25 = dma.hbm_to_vmem [thread:$0]  %s0, 256, %s20, [#allocation3], 64, 64, 4
    $region5: #{tpu_custom_call.1} parent=1 // pred_fallthru
      _
    // Predicated region
    $region6: #{tpu_custom_call.1} parent=1 // pred_check
      _
    $region7: #{tpu_custom_call.1} parent=1 // pred_check_branch
      %27 = sbr.rel (0) target = $region9
    $region8: #{tpu_custom_call.1} parent=1 // pred_region
      %s29 = ssub.s32 512, 512
      %30 = vsyncadd [#allocation7], %s29
      %s31 = sshll.u32 [#allocation6], 4
      %s32 = int_to_ptr.vmem [resolvable:$true] %s31
      %37 = dma.hbm_to_vmem [thread:$0]  %s1, 512, %s32, [#allocation7], 128, 128, 8
    $region9: #{tpu_custom_call.1} parent=1 // pred_fallthru
      _
    // Predicated region
    $region10: #{tpu_custom_call.1} parent=1 // pred_check
      _
    $region11: #{tpu_custom_call.1} parent=1 // pred_check_branch
      %39 = sbr.rel (0) target = $region13
    $region12: #{tpu_custom_call.1} parent=1 // pred_region
      %s41 = ssub.s32 6144, 6144
      %42 = vsyncadd [#allocation7], %s41
      %s43 = sshll.u32 [#allocation8], 4
      %s44 = int_to_ptr.vmem [resolvable:$true] %s43
      %49 = dma.hbm_to_vmem [thread:$0]  %s2, 6144, %s44, [#allocation7], 128, 128, 8
    $region13: #{tpu_custom_call.1} parent=1 // pred_fallthru
      _
    // Predicated region
    $region14: #{tpu_custom_call.1} parent=1 // pred_check
      _
    $region15: #{tpu_custom_call.1} parent=1 // pred_check_branch
      %51 = sbr.rel (0) target = $region17
    $region16: #{tpu_custom_call.1} parent=1 // pred_region
      _
    $region17: #{tpu_custom_call.1} parent=1 // pred_fallthru
      _
    // Predicated region
    $region18: #{tpu_custom_call.1} parent=1 // pred_check
      _
    $region19: #{tpu_custom_call.1} parent=1 // pred_check_branch
      %53 = sbr.rel (0) target = $region21
    $region20: #{tpu_custom_call.1} parent=1 // pred_region
      %s55 = ssub.s32 16, 16
      %56 = vsyncadd [#allocation5], %s55
      %s58 = sshll.u32 %s4, 4
      %s59 = int_to_ptr.vmem [resolvable:$true] %s58
      %61 = dma.vmem_to_smem %s59, 16, [#allocation9], [#allocation5]
    $region21: #{tpu_custom_call.1} parent=1 // pred_fallthru
      _
    // Predicated region
    $region22: #{tpu_custom_call.1} parent=1 // pred_check
      _
    $region23: #{tpu_custom_call.1} parent=1 // pred_check_branch
      %63 = sbr.rel (0) target = $region25
    $region24: #{tpu_custom_call.1} parent=1 // pred_region
      %64 = dma.done [#allocation3], 256
    $region25: #{tpu_custom_call.1} parent=1 // pred_fallthru
      _
    // Predicated region
    $region26: #{tpu_custom_call.1} parent=1 // pred_check
      _
    $region27: #{tpu_custom_call.1} parent=1 // pred_check_branch
      %66 = sbr.rel (0) target = $region29
    $region28: #{tpu_custom_call.1} parent=1 // pred_region
      %67 = dma.done [#allocation7], 512
    $region29: #{tpu_custom_call.1} parent=1 // pred_fallthru
      _
    // Predicated region
    $region30: #{tpu_custom_call.1} parent=1 // pred_check
      _
    $region31: #{tpu_custom_call.1} parent=1 // pred_check_branch
      %69 = sbr.rel (0) target = $region33
    $region32: #{tpu_custom_call.1} parent=1 // pred_region
      %70 = dma.done [#allocation7], 6144
    $region33: #{tpu_custom_call.1} parent=1 // pred_fallthru
      _
    // Predicated region
    $region34: #{tpu_custom_call.1} parent=1 // pred_check
      _
    $region35: #{tpu_custom_call.1} parent=1 // pred_check_branch
      %72 = sbr.rel (0) target = $region37
    $region36: #{tpu_custom_call.1} parent=1 // pred_region
      %73 = dma.done [#allocation5], 16
    $region37: #{tpu_custom_call.1} parent=1 // pred_fallthru
      _
    %74 = sfence
    %v75 = vld [vmem:[#allocation2] sm:$0xf]
    %v76 = vld [vmem:[#allocation2 + $0x4] sm:$0xf]
    %v77 = vld [vmem:[#allocation2 + $0x8] sm:$0xf]
    %v78 = vld [vmem:[#allocation2 + $0xc] sm:$0xf]
    %v79 = vunpack.c.l.bf16 %v75
    %v80 = vunpack.c.l.bf16 %v76
    %v81 = vunpack.c.l.bf16 %v77
    %v82 = vunpack.c.l.bf16 %v78
    %v83 = vld [vmem:[#allocation6] sm:$0xff]
    %v84 = vld [vmem:[#allocation6 + $0x8] sm:$0xff]
    %v85 = vld [vmem:[#allocation6 + $0x10] sm:$0xff]
    %v86 = vld [vmem:[#allocation6 + $0x18] sm:$0xff]
    %v87 = vld [vmem:[#allocation8] sm:$0xff]
    %v88 = vld [vmem:[#allocation8 + $0x8] sm:$0xff]
    %v89 = vld [vmem:[#allocation8 + $0x10] sm:$0xff]
    %v90 = vld [vmem:[#allocation8 + $0x18] sm:$0xff]
    %v91 = vld [vmem:[#allocation8 + $0x20] sm:$0xff]
    %v92 = vld [vmem:[#allocation8 + $0x28] sm:$0xff]
    %v93 = vld [vmem:[#allocation8 + $0x30] sm:$0xff]
    %v94 = vld [vmem:[#allocation8 + $0x38] sm:$0xff]
    %v95 = vld [vmem:[#allocation8 + $0x40] sm:$0xff]
    %v96 = vld [vmem:[#allocation8 + $0x48] sm:$0xff]
    %v97 = vld [vmem:[#allocation8 + $0x50] sm:$0xff]
    %v98 = vld [vmem:[#allocation8 + $0x58] sm:$0xff]
    %v99 = vld [vmem:[#allocation8 + $0x60] sm:$0xff]
    %v100 = vld [vmem:[#allocation8 + $0x68] sm:$0xff]
    %v101 = vld [vmem:[#allocation8 + $0x70] sm:$0xff]
    %v102 = vld [vmem:[#allocation8 + $0x78] sm:$0xff]
    %103 = vmatprep.subr.mxu0 0.0
    %104 = vmatpush1.msra.mxu0 %v102
    %105 = vmatprep.subr.mxu0 0.0
    %106 = vmatpush1.msra.mxu0 %v101
    %107 = vmatprep.subr.mxu0 0.0
    %108 = vmatpush1.msra.mxu0 %v100
    %109 = vmatprep.subr.mxu0 0.0
    %110 = vmatpush1.msra.mxu0 %v99
    %111 = vmatprep.subr.mxu0 0.0
    %112 = vmatpush1.msra.mxu0 %v98
    %113 = vmatprep.subr.mxu0 0.0
    %114 = vmatpush1.msra.mxu0 %v97
    %115 = vmatprep.subr.mxu0 0.0
    %116 = vmatpush1.msra.mxu0 %v96
    %117 = vmatprep.subr.mxu0 0.0
    %118 = vmatpush1.msra.mxu0 %v95
    %119 = vmatprep.subr.mxu0 0.0
    %120 = vmatpush1.msra.mxu0 %v94
    %121 = vmatprep.subr.mxu0 0.0
    %122 = vmatpush1.msra.mxu0 %v93
    %123 = vmatprep.subr.mxu0 0.0
    %124 = vmatpush1.msra.mxu0 %v92
    %125 = vmatprep.subr.mxu0 0.0
    %126 = vmatpush1.msra.mxu0 %v91
    %127 = vmatprep.subr.mxu0 0.0
    %128 = vmatpush1.msra.mxu0 %v90
    %129 = vmatprep.subr.mxu0 0.0
    %130 = vmatpush1.msra.mxu0 %v89
    %131 = vmatprep.subr.mxu0 0.0
    %132 = vmatpush1.msra.mxu0 %v88
    %133 = vmatprep.subr.mxu0 0.0
    %134 = vmatpush1.msra.mxu0 %v87
    %135 = vmatprep.subr.mxu0 0.0
    %136 = vmatpush2.msra.mxu0 0.0
    %137 = vmatprep.subr.mxu0 0.0
    %138 = vmatpush2.msra.mxu0 0.0
    %139 = vmatprep.subr.mxu0 0.0
    %140 = vmatpush2.msra.mxu0 0.0
    %141 = vmatprep.subr.mxu0 0.0
    %142 = vmatpush2.msra.mxu0 0.0
    %143 = vmatprep.subr.mxu0 0.0
    %144 = vmatpush2.msra.mxu0 0.0
    %145 = vmatprep.subr.mxu0 0.0
    %146 = vmatpush2.msra.mxu0 0.0
    %147 = vmatprep.subr.mxu0 0.0
    %148 = vmatpush2.msra.mxu0 0.0
    %149 = vmatprep.subr.mxu0 0.0
    %150 = vmatpush2.msra.mxu0 0.0
    %151 = vmatprep.subr.mxu0 0.0
    %152 = vmatpush2.msra.mxu0 0.0
    %153 = vmatprep.subr.mxu0 0.0
    %154 = vmatpush2.msra.mxu0 0.0
    %155 = vmatprep.subr.mxu0 0.0
    %156 = vmatpush2.msra.mxu0 0.0
    %157 = vmatprep.subr.mxu0 0.0
    %158 = vmatpush2.msra.mxu0 0.0
    %159 = vmatprep.subr.mxu0 0.0
    %160 = vmatpush2.msra.mxu0 0.0
    %161 = vmatprep.subr.mxu0 0.0
    %162 = vmatpush2.msra.mxu0 0.0
    %163 = vmatprep.subr.mxu0 0.0
    %164 = vmatpush2.msra.mxu0 0.0
    %165 = vmatprep.subr.mxu0 0.0
    %166 = vmatpush2.msra.mxu0 0.0
    %167 = vmatprep.mubr.f32.mxu0 0.0
    %168 = vmatmul.mubr.f32.gmra.mxu0 %v83
    %v169 = vpop.f32.mrf.mxu0
    %v170 = vadd.f32 0.0, %v169
    %v171 = vpop.f32.mrf.mxu0
    %172 = vmatprep.mubr.f32.mxu0 0.0
    %173 = vmatmul.mubr.f32.gmra.mxu0 %v84
    %v174 = vpop.f32.mrf.mxu0
    %v175 = vadd.f32 0.0, %v174
    %v176 = vpop.f32.mrf.mxu0
    %177 = vmatprep.mubr.f32.mxu0 0.0
    %178 = vmatmul.mubr.f32.gmra.mxu0 %v85
    %v179 = vpop.f32.mrf.mxu0
    %v180 = vadd.f32 0.0, %v179
    %v181 = vpop.f32.mrf.mxu0
    %182 = vmatprep.mubr.f32.mxu0 0.0
    %183 = vmatmul.mubr.f32.gmra.mxu0 %v86
    %v184 = vpop.f32.mrf.mxu0
    %v185 = vadd.f32 0.0, %v184
    %v186 = vpop.f32.mrf.mxu0
    %187 = vdwg.mxu0
    %s188 = sld [smem:[#allocation9]]
    %s189 = sadd.f32 %s188, 1.0
    %v190 = vstv %s189
    %v191 = vmul.f32 %v190, %v170
    %v192 = vmul.f32 %v190, %v175
    %v193 = vmul.f32 %v190, %v180
    %v194 = vmul.f32 %v190, %v185
    %vm195 = vcmask 261120
    %v197 = vsel %vm195, %v79, 0
    %v200 = vsel %vm195, %v80, 0
    %v203 = vsel %vm195, %v81, 0
    %v206 = vsel %vm195, %v82, 0
    %208 = vmatprep.subr.mxu0 0.0
    %209 = vmatpush1.msra.mxu0 0.0
    %210 = vmatprep.subr.mxu0 0.0
    %211 = vmatpush1.msra.mxu0 0.0
    %212 = vmatprep.subr.mxu0 0.0
    %213 = vmatpush1.msra.mxu0 0.0
    %214 = vmatprep.subr.mxu0 0.0
    %215 = vmatpush1.msra.mxu0 0.0
    %216 = vmatprep.subr.mxu0 0.0
    %217 = vmatpush1.msra.mxu0 0.0
    %218 = vmatprep.subr.mxu0 0.0
    %219 = vmatpush1.msra.mxu0 0.0
    %220 = vmatprep.subr.mxu0 0.0
    %221 = vmatpush1.msra.mxu0 0.0
    %222 = vmatprep.subr.mxu0 0.0
    %223 = vmatpush1.msra.mxu0 0.0
    %224 = vmatprep.subr.mxu0 0.0
    %225 = vmatpush1.msra.mxu0 0.0
    %226 = vmatprep.subr.mxu0 0.0
    %227 = vmatpush1.msra.mxu0 0.0
    %228 = vmatprep.subr.mxu0 0.0
    %229 = vmatpush1.msra.mxu0 0.0
    %230 = vmatprep.subr.mxu0 0.0
    %231 = vmatpush1.msra.mxu0 0.0
    %232 = vmatprep.subr.mxu0 0.0
    %233 = vmatpush1.msra.mxu0 %v185
    %234 = vmatprep.subr.mxu0 0.0
    %235 = vmatpush1.msra.mxu0 %v180
    %236 = vmatprep.subr.mxu0 0.0
    %237 = vmatpush1.msra.mxu0 %v175
    %238 = vmatprep.subr.mxu0 0.0
    %239 = vmatpush1.msra.mxu0 %v170
    %240 = vmatprep.subr.mxu0 0.0
    %241 = vmatpush2.msra.mxu0 0.0
    %242 = vmatprep.subr.mxu0 0.0
    %243 = vmatpush2.msra.mxu0 0.0
    %244 = vmatprep.subr.mxu0 0.0
    %245 = vmatpush2.msra.mxu0 0.0
    %246 = vmatprep.subr.mxu0 0.0
    %247 = vmatpush2.msra.mxu0 0.0
    %248 = vmatprep.subr.mxu0 0.0
    %249 = vmatpush2.msra.mxu0 0.0
    %250 = vmatprep.subr.mxu0 0.0
    %251 = vmatpush2.msra.mxu0 0.0
    %252 = vmatprep.subr.mxu0 0.0
    %253 = vmatpush2.msra.mxu0 0.0
    %254 = vmatprep.subr.mxu0 0.0
    %255 = vmatpush2.msra.mxu0 0.0
    %256 = vmatprep.subr.mxu0 0.0
    %257 = vmatpush2.msra.mxu0 0.0
    %258 = vmatprep.subr.mxu0 0.0
    %259 = vmatpush2.msra.mxu0 0.0
    %260 = vmatprep.subr.mxu0 0.0
    %261 = vmatpush2.msra.mxu0 0.0
    %262 = vmatprep.subr.mxu0 0.0
    %263 = vmatpush2.msra.mxu0 0.0
    %264 = vmatprep.subr.mxu0 0.0
    %265 = vmatpush2.msra.mxu0 0.0
    %266 = vmatprep.subr.mxu0 0.0
    %267 = vmatpush2.msra.mxu0 0.0
    %268 = vmatprep.subr.mxu0 0.0
    %269 = vmatpush2.msra.mxu0 0.0
    %270 = vmatprep.subr.mxu0 0.0
    %271 = vmatpush2.msra.mxu0 0.0
    %272 = vmatprep.mubr.f32.mxu0 0.0
    %273 = vmatmul.mubr.f32.gmra.mxu0 %v197
    %v274 = vpop.f32.mrf.mxu0
    %v275 = vadd.f32 %v191, %v274
    %v276 = vpop.f32.mrf.mxu0
    %277 = vmatprep.mubr.f32.mxu0 0.0
    %278 = vmatmul.mubr.f32.gmra.mxu0 %v200
    %v279 = vpop.f32.mrf.mxu0
    %v280 = vadd.f32 %v192, %v279
    %v281 = vpop.f32.mrf.mxu0
    %282 = vmatprep.mubr.f32.mxu0 0.0
    %283 = vmatmul.mubr.f32.gmra.mxu0 %v203
    %v284 = vpop.f32.mrf.mxu0
    %v285 = vadd.f32 %v193, %v284
    %v286 = vpop.f32.mrf.mxu0
    %287 = vmatprep.mubr.f32.mxu0 0.0
    %288 = vmatmul.mubr.f32.gmra.mxu0 %v206
    %v289 = vpop.f32.mrf.mxu0
    %v290 = vadd.f32 %v194, %v289
    %v291 = vpop.f32.mrf.mxu0
    %292 = vdwg.mxu0
    %v293 = vld [vmem:[%s3] sm:$0x1]
    %v295 = vlaneseq
    %v296 = vshrl.u32 %v295, 7
    %v297 = vsub.s32 0, %v296
    %v298 = vrot.slane %v293, %v297
    %v300 = vadd.f32 %v275, %v298
    %v301 = vadd.f32 %v280, %v298
    %v302 = vadd.f32 %v285, %v298
    %v303 = vadd.f32 %v290, %v298
    %v304 = vmax.f32 %v300, 0.0
    %v305 = vmax.f32 %v301, 0.0
    %v306 = vmax.f32 %v302, 0.0
    %v307 = vmax.f32 %v303, 0.0
    %s308 = scalar_lea.vmem [#allocation8], 128
    %v309 = vld [vmem:[%s308] sm:$0xff]
    %v310 = vld [vmem:[%s308 + $0x8] sm:$0xff]
    %v311 = vld [vmem:[%s308 + $0x10] sm:$0xff]
    %v312 = vld [vmem:[%s308 + $0x18] sm:$0xff]
    %v313 = vld [vmem:[%s308 + $0x20] sm:$0xff]
    %v314 = vld [vmem:[%s308 + $0x28] sm:$0xff]
    %v315 = vld [vmem:[%s308 + $0x30] sm:$0xff]
    %v316 = vld [vmem:[%s308 + $0x38] sm:$0xff]
    %v317 = vld [vmem:[%s308 + $0x40] sm:$0xff]
    %v318 = vld [vmem:[%s308 + $0x48] sm:$0xff]
    %v319 = vld [vmem:[%s308 + $0x50] sm:$0xff]
    %v320 = vld [vmem:[%s308 + $0x58] sm:$0xff]
    %v321 = vld [vmem:[%s308 + $0x60] sm:$0xff]
    %v322 = vld [vmem:[%s308 + $0x68] sm:$0xff]
    %v323 = vld [vmem:[%s308 + $0x70] sm:$0xff]
    %v324 = vld [vmem:[%s308 + $0x78] sm:$0xff]
    %325 = vmatprep.subr.mxu0 0.0
    %326 = vmatpush1.msra.mxu0 %v324
    %327 = vmatprep.subr.mxu0 0.0
    %328 = vmatpush1.msra.mxu0 %v323
    %329 = vmatprep.subr.mxu0 0.0
    %330 = vmatpush1.msra.mxu0 %v322
    %331 = vmatprep.subr.mxu0 0.0
    %332 = vmatpush1.msra.mxu0 %v321
    %333 = vmatprep.subr.mxu0 0.0
    %334 = vmatpush1.msra.mxu0 %v320
    %335 = vmatprep.subr.mxu0 0.0
    %336 = vmatpush1.msra.mxu0 %v319
    %337 = vmatprep.subr.mxu0 0.0
    %338 = vmatpush1.msra.mxu0 %v318
    %339 = vmatprep.subr.mxu0 0.0
    %340 = vmatpush1.msra.mxu0 %v317
    %341 = vmatprep.subr.mxu0 0.0
    %342 = vmatpush1.msra.mxu0 %v316
    %343 = vmatprep.subr.mxu0 0.0
    %344 = vmatpush1.msra.mxu0 %v315
    %345 = vmatprep.subr.mxu0 0.0
    %346 = vmatpush1.msra.mxu0 %v314
    %347 = vmatprep.subr.mxu0 0.0
    %348 = vmatpush1.msra.mxu0 %v313
    %349 = vmatprep.subr.mxu0 0.0
    %350 = vmatpush1.msra.mxu0 %v312
    %351 = vmatprep.subr.mxu0 0.0
    %352 = vmatpush1.msra.mxu0 %v311
    %353 = vmatprep.subr.mxu0 0.0
    %354 = vmatpush1.msra.mxu0 %v310
    %355 = vmatprep.subr.mxu0 0.0
    %356 = vmatpush1.msra.mxu0 %v309
    %357 = vmatprep.subr.mxu0 0.0
    %358 = vmatpush2.msra.mxu0 0.0
    %359 = vmatprep.subr.mxu0 0.0
    %360 = vmatpush2.msra.mxu0 0.0
    %361 = vmatprep.subr.mxu0 0.0
    %362 = vmatpush2.msra.mxu0 0.0
    %363 = vmatprep.subr.mxu0 0.0
    %364 = vmatpush2.msra.mxu0 0.0
    %365 = vmatprep.subr.mxu0 0.0
    %366 = vmatpush2.msra.mxu0 0.0
    %367 = vmatprep.subr.mxu0 0.0
    %368 = vmatpush2.msra.mxu0 0.0
    %369 = vmatprep.subr.mxu0 0.0
    %370 = vmatpush2.msra.mxu0 0.0
    %371 = vmatprep.subr.mxu0 0.0
    %372 = vmatpush2.msra.mxu0 0.0
    %373 = vmatprep.subr.mxu0 0.0
    %374 = vmatpush2.msra.mxu0 0.0
    %375 = vmatprep.subr.mxu0 0.0
    %376 = vmatpush2.msra.mxu0 0.0
    %377 = vmatprep.subr.mxu0 0.0
    %378 = vmatpush2.msra.mxu0 0.0
    %379 = vmatprep.subr.mxu0 0.0
    %380 = vmatpush2.msra.mxu0 0.0
    %381 = vmatprep.subr.mxu0 0.0
    %382 = vmatpush2.msra.mxu0 0.0
    %383 = vmatprep.subr.mxu0 0.0
    %384 = vmatpush2.msra.mxu0 0.0
    %385 = vmatprep.subr.mxu0 0.0
    %386 = vmatpush2.msra.mxu0 0.0
    %387 = vmatprep.subr.mxu0 0.0
    %388 = vmatpush2.msra.mxu0 0.0
    %389 = vmatprep.mubr.f32.mxu0 0.0
    %390 = vmatmul.mubr.f32.gmra.mxu0 %v304
    %v391 = vpop.f32.mrf.mxu0
    %v392 = vadd.f32 0.0, %v391
    %v393 = vpop.f32.mrf.mxu0
    %394 = vmatprep.mubr.f32.mxu0 0.0
    %395 = vmatmul.mubr.f32.gmra.mxu0 %v305
    %v396 = vpop.f32.mrf.mxu0
    %v397 = vadd.f32 0.0, %v396
    %v398 = vpop.f32.mrf.mxu0
    %399 = vmatprep.mubr.f32.mxu0 0.0
    %400 = vmatmul.mubr.f32.gmra.mxu0 %v306
    %v401 = vpop.f32.mrf.mxu0
    %v402 = vadd.f32 0.0, %v401
    %v403 = vpop.f32.mrf.mxu0
    %404 = vmatprep.mubr.f32.mxu0 0.0
    %405 = vmatmul.mubr.f32.gmra.mxu0 %v307
    %v406 = vpop.f32.mrf.mxu0
    %v407 = vadd.f32 0.0, %v406
    %v408 = vpop.f32.mrf.mxu0
    %409 = vdwg.mxu0
    %s410 = sld [smem:[#allocation9 + $0x1]]
    %s411 = sadd.f32 %s410, 1.0
    %v412 = vstv %s411
    %v413 = vmul.f32 %v412, %v392
    %v414 = vmul.f32 %v412, %v397
    %v415 = vmul.f32 %v412, %v402
    %v416 = vmul.f32 %v412, %v407
    %417 = vmatprep.subr.mxu0 0.0
    %418 = vmatpush1.msra.mxu0 0.0
    %419 = vmatprep.subr.mxu0 0.0
    %420 = vmatpush1.msra.mxu0 0.0
    %421 = vmatprep.subr.mxu0 0.0
    %422 = vmatpush1.msra.mxu0 0.0
    %423 = vmatprep.subr.mxu0 0.0
    %424 = vmatpush1.msra.mxu0 0.0
    %425 = vmatprep.subr.mxu0 0.0
    %426 = vmatpush1.msra.mxu0 0.0
    %427 = vmatprep.subr.mxu0 0.0
    %428 = vmatpush1.msra.mxu0 0.0
    %429 = vmatprep.subr.mxu0 0.0
    %430 = vmatpush1.msra.mxu0 0.0
    %431 = vmatprep.subr.mxu0 0.0
    %432 = vmatpush1.msra.mxu0 0.0
    %433 = vmatprep.subr.mxu0 0.0
    %434 = vmatpush1.msra.mxu0 0.0
    %435 = vmatprep.subr.mxu0 0.0
    %436 = vmatpush1.msra.mxu0 0.0
    %437 = vmatprep.subr.mxu0 0.0
    %438 = vmatpush1.msra.mxu0 0.0
    %439 = vmatprep.subr.mxu0 0.0
    %440 = vmatpush1.msra.mxu0 0.0
    %441 = vmatprep.subr.mxu0 0.0
    %442 = vmatpush1.msra.mxu0 %v407
    %443 = vmatprep.subr.mxu0 0.0
    %444 = vmatpush1.msra.mxu0 %v402
    %445 = vmatprep.subr.mxu0 0.0
    %446 = vmatpush1.msra.mxu0 %v397
    %447 = vmatprep.subr.mxu0 0.0
    %448 = vmatpush1.msra.mxu0 %v392
    %449 = vmatprep.subr.mxu0 0.0
    %450 = vmatpush2.msra.mxu0 0.0
    %451 = vmatprep.subr.mxu0 0.0
    %452 = vmatpush2.msra.mxu0 0.0
    %453 = vmatprep.subr.mxu0 0.0
    %454 = vmatpush2.msra.mxu0 0.0
    %455 = vmatprep.subr.mxu0 0.0
    %456 = vmatpush2.msra.mxu0 0.0
    %457 = vmatprep.subr.mxu0 0.0
    %458 = vmatpush2.msra.mxu0 0.0
    %459 = vmatprep.subr.mxu0 0.0
    %460 = vmatpush2.msra.mxu0 0.0
    %461 = vmatprep.subr.mxu0 0.0
    %462 = vmatpush2.msra.mxu0 0.0
    %463 = vmatprep.subr.mxu0 0.0
    %464 = vmatpush2.msra.mxu0 0.0
    %465 = vmatprep.subr.mxu0 0.0
    %466 = vmatpush2.msra.mxu0 0.0
    %467 = vmatprep.subr.mxu0 0.0
    %468 = vmatpush2.msra.mxu0 0.0
    %469 = vmatprep.subr.mxu0 0.0
    %470 = vmatpush2.msra.mxu0 0.0
    %471 = vmatprep.subr.mxu0 0.0
    %472 = vmatpush2.msra.mxu0 0.0
    %473 = vmatprep.subr.mxu0 0.0
    %474 = vmatpush2.msra.mxu0 0.0
    %475 = vmatprep.subr.mxu0 0.0
    %476 = vmatpush2.msra.mxu0 0.0
    %477 = vmatprep.subr.mxu0 0.0
    %478 = vmatpush2.msra.mxu0 0.0
    %479 = vmatprep.subr.mxu0 0.0
    %480 = vmatpush2.msra.mxu0 0.0
    %481 = vmatprep.mubr.f32.mxu0 0.0
    %482 = vmatmul.mubr.f32.gmra.mxu0 %v197
    %v483 = vpop.f32.mrf.mxu0
    %v484 = vadd.f32 %v413, %v483
    %v485 = vpop.f32.mrf.mxu0
    %486 = vmatprep.mubr.f32.mxu0 0.0
    %487 = vmatmul.mubr.f32.gmra.mxu0 %v200
    %v488 = vpop.f32.mrf.mxu0
    %v489 = vadd.f32 %v414, %v488
    %v490 = vpop.f32.mrf.mxu0
    %491 = vmatprep.mubr.f32.mxu0 0.0
    %492 = vmatmul.mubr.f32.gmra.mxu0 %v203
    %v493 = vpop.f32.mrf.mxu0
    %v494 = vadd.f32 %v415, %v493
    %v495 = vpop.f32.mrf.mxu0
    %496 = vmatprep.mubr.f32.mxu0 0.0
    %497 = vmatmul.mubr.f32.gmra.mxu0 %v206
    %v498 = vpop.f32.mrf.mxu0
    %v499 = vadd.f32 %v416, %v498
    %v500 = vpop.f32.mrf.mxu0
    %501 = vdwg.mxu0
    %s502 = scalar_lea.vmem %s3, 1
    %v503 = vld [vmem:[%s502] sm:$0x1]
    %v505 = vlaneseq
    %v506 = vshrl.u32 %v505, 7
    %v507 = vsub.s32 0, %v506
    %v508 = vrot.slane %v503, %v507
    %v510 = vadd.f32 %v484, %v508
    %v511 = vadd.f32 %v489, %v508
    %v512 = vadd.f32 %v494, %v508
    %v513 = vadd.f32 %v499, %v508
    %v514 = vmax.f32 %v510, 0.0
    %v515 = vmax.f32 %v511, 0.0
    %v516 = vmax.f32 %v512, 0.0
    %v517 = vmax.f32 %v513, 0.0
    %s518 = scalar_lea.vmem [#allocation8], 256
    %v519 = vld [vmem:[%s518] sm:$0xff]
    %v520 = vld [vmem:[%s518 + $0x8] sm:$0xff]
    %v521 = vld [vmem:[%s518 + $0x10] sm:$0xff]
    %v522 = vld [vmem:[%s518 + $0x18] sm:$0xff]
    %v523 = vld [vmem:[%s518 + $0x20] sm:$0xff]
    %v524 = vld [vmem:[%s518 + $0x28] sm:$0xff]
    %v525 = vld [vmem:[%s518 + $0x30] sm:$0xff]
    %v526 = vld [vmem:[%s518 + $0x38] sm:$0xff]
    %v527 = vld [vmem:[%s518 + $0x40] sm:$0xff]
    %v528 = vld [vmem:[%s518 + $0x48] sm:$0xff]
    %v529 = vld [vmem:[%s518 + $0x50] sm:$0xff]
    %v530 = vld [vmem:[%s518 + $0x58] sm:$0xff]
    %v531 = vld [vmem:[%s518 + $0x60] sm:$0xff]
    %v532 = vld [vmem:[%s518 + $0x68] sm:$0xff]
    %v533 = vld [vmem:[%s518 + $0x70] sm:$0xff]
    %v534 = vld [vmem:[%s518 + $0x78] sm:$0xff]
    %535 = vmatprep.subr.mxu0 0.0
    %536 = vmatpush1.msra.mxu0 %v534
    %537 = vmatprep.subr.mxu0 0.0
    %538 = vmatpush1.msra.mxu0 %v533
    %539 = vmatprep.subr.mxu0 0.0
    %540 = vmatpush1.msra.mxu0 %v532
    %541 = vmatprep.subr.mxu0 0.0
    %542 = vmatpush1.msra.mxu0 %v531
    %543 = vmatprep.subr.mxu0 0.0
    %544 = vmatpush1.msra.mxu0 %v530
    %545 = vmatprep.subr.mxu0 0.0
    %546 = vmatpush1.msra.mxu0 %v529
    %547 = vmatprep.subr.mxu0 0.0
    %548 = vmatpush1.msra.mxu0 %v528
    %549 = vmatprep.subr.mxu0 0.0
    %550 = vmatpush1.msra.mxu0 %v527
    %551 = vmatprep.subr.mxu0 0.0
    %552 = vmatpush1.msra.mxu0 %v526
    %553 = vmatprep.subr.mxu0 0.0
    %554 = vmatpush1.msra.mxu0 %v525
    %555 = vmatprep.subr.mxu0 0.0
    %556 = vmatpush1.msra.mxu0 %v524
    %557 = vmatprep.subr.mxu0 0.0
    %558 = vmatpush1.msra.mxu0 %v523
    %559 = vmatprep.subr.mxu0 0.0
    %560 = vmatpush1.msra.mxu0 %v522
    %561 = vmatprep.subr.mxu0 0.0
    %562 = vmatpush1.msra.mxu0 %v521
    %563 = vmatprep.subr.mxu0 0.0
    %564 = vmatpush1.msra.mxu0 %v520
    %565 = vmatprep.subr.mxu0 0.0
    %566 = vmatpush1.msra.mxu0 %v519
    %567 = vmatprep.subr.mxu0 0.0
    %568 = vmatpush2.msra.mxu0 0.0
    %569 = vmatprep.subr.mxu0 0.0
    %570 = vmatpush2.msra.mxu0 0.0
    %571 = vmatprep.subr.mxu0 0.0
    %572 = vmatpush2.msra.mxu0 0.0
    %573 = vmatprep.subr.mxu0 0.0
    %574 = vmatpush2.msra.mxu0 0.0
    %575 = vmatprep.subr.mxu0 0.0
    %576 = vmatpush2.msra.mxu0 0.0
    %577 = vmatprep.subr.mxu0 0.0
    %578 = vmatpush2.msra.mxu0 0.0
    %579 = vmatprep.subr.mxu0 0.0
    %580 = vmatpush2.msra.mxu0 0.0
    %581 = vmatprep.subr.mxu0 0.0
    %582 = vmatpush2.msra.mxu0 0.0
    %583 = vmatprep.subr.mxu0 0.0
    %584 = vmatpush2.msra.mxu0 0.0
    %585 = vmatprep.subr.mxu0 0.0
    %586 = vmatpush2.msra.mxu0 0.0
    %587 = vmatprep.subr.mxu0 0.0
    %588 = vmatpush2.msra.mxu0 0.0
    %589 = vmatprep.subr.mxu0 0.0
    %590 = vmatpush2.msra.mxu0 0.0
    %591 = vmatprep.subr.mxu0 0.0
    %592 = vmatpush2.msra.mxu0 0.0
    %593 = vmatprep.subr.mxu0 0.0
    %594 = vmatpush2.msra.mxu0 0.0
    %595 = vmatprep.subr.mxu0 0.0
    %596 = vmatpush2.msra.mxu0 0.0
    %597 = vmatprep.subr.mxu0 0.0
    %598 = vmatpush2.msra.mxu0 0.0
    %599 = vmatprep.mubr.f32.mxu0 0.0
    %600 = vmatmul.mubr.f32.gmra.mxu0 %v514
    %v601 = vpop.f32.mrf.mxu0
    %v602 = vadd.f32 0.0, %v601
    %v603 = vpop.f32.mrf.mxu0
    %604 = vmatprep.mubr.f32.mxu0 0.0
    %605 = vmatmul.mubr.f32.gmra.mxu0 %v515
    %v606 = vpop.f32.mrf.mxu0
    %v607 = vadd.f32 0.0, %v606
    %v608 = vpop.f32.mrf.mxu0
    %609 = vmatprep.mubr.f32.mxu0 0.0
    %610 = vmatmul.mubr.f32.gmra.mxu0 %v516
    %v611 = vpop.f32.mrf.mxu0
    %v612 = vadd.f32 0.0, %v611
    %v613 = vpop.f32.mrf.mxu0
    %614 = vmatprep.mubr.f32.mxu0 0.0
    %615 = vmatmul.mubr.f32.gmra.mxu0 %v517
    %v616 = vpop.f32.mrf.mxu0
    %v617 = vadd.f32 0.0, %v616
    %v618 = vpop.f32.mrf.mxu0
    %619 = vdwg.mxu0
    %s620 = sld [smem:[#allocation9 + $0x2]]
    %s621 = sadd.f32 %s620, 1.0
    %v622 = vstv %s621
    %v623 = vmul.f32 %v622, %v602
    %v624 = vmul.f32 %v622, %v607
    %v625 = vmul.f32 %v622, %v612
    %v626 = vmul.f32 %v622, %v617
    %627 = vmatprep.subr.mxu0 0.0
    %628 = vmatpush1.msra.mxu0 0.0
    %629 = vmatprep.subr.mxu0 0.0
    %630 = vmatpush1.msra.mxu0 0.0
    %631 = vmatprep.subr.mxu0 0.0
    %632 = vmatpush1.msra.mxu0 0.0
    %633 = vmatprep.subr.mxu0 0.0
    %634 = vmatpush1.msra.mxu0 0.0
    %635 = vmatprep.subr.mxu0 0.0
    %636 = vmatpush1.msra.mxu0 0.0
    %637 = vmatprep.subr.mxu0 0.0
    %638 = vmatpush1.msra.mxu0 0.0
    %639 = vmatprep.subr.mxu0 0.0
    %640 = vmatpush1.msra.mxu0 0.0
    %641 = vmatprep.subr.mxu0 0.0
    %642 = vmatpush1.msra.mxu0 0.0
    %643 = vmatprep.subr.mxu0 0.0
    %644 = vmatpush1.msra.mxu0 0.0
    %645 = vmatprep.subr.mxu0 0.0
    %646 = vmatpush1.msra.mxu0 0.0
    %647 = vmatprep.subr.mxu0 0.0
    %648 = vmatpush1.msra.mxu0 0.0
    %649 = vmatprep.subr.mxu0 0.0
    %650 = vmatpush1.msra.mxu0 0.0
    %651 = vmatprep.subr.mxu0 0.0
    %652 = vmatpush1.msra.mxu0 %v617
    %653 = vmatprep.subr.mxu0 0.0
    %654 = vmatpush1.msra.mxu0 %v612
    %655 = vmatprep.subr.mxu0 0.0
    %656 = vmatpush1.msra.mxu0 %v607
    %657 = vmatprep.subr.mxu0 0.0
    %658 = vmatpush1.msra.mxu0 %v602
    %659 = vmatprep.subr.mxu0 0.0
    %660 = vmatpush2.msra.mxu0 0.0
    %661 = vmatprep.subr.mxu0 0.0
    %662 = vmatpush2.msra.mxu0 0.0
    %663 = vmatprep.subr.mxu0 0.0
    %664 = vmatpush2.msra.mxu0 0.0
    %665 = vmatprep.subr.mxu0 0.0
    %666 = vmatpush2.msra.mxu0 0.0
    %667 = vmatprep.subr.mxu0 0.0
    %668 = vmatpush2.msra.mxu0 0.0
    %669 = vmatprep.subr.mxu0 0.0
    %670 = vmatpush2.msra.mxu0 0.0
    %671 = vmatprep.subr.mxu0 0.0
    %672 = vmatpush2.msra.mxu0 0.0
    %673 = vmatprep.subr.mxu0 0.0
    %674 = vmatpush2.msra.mxu0 0.0
    %675 = vmatprep.subr.mxu0 0.0
    %676 = vmatpush2.msra.mxu0 0.0
    %677 = vmatprep.subr.mxu0 0.0
    %678 = vmatpush2.msra.mxu0 0.0
    %679 = vmatprep.subr.mxu0 0.0
    %680 = vmatpush2.msra.mxu0 0.0
    %681 = vmatprep.subr.mxu0 0.0
    %682 = vmatpush2.msra.mxu0 0.0
    %683 = vmatprep.subr.mxu0 0.0
    %684 = vmatpush2.msra.mxu0 0.0
    %685 = vmatprep.subr.mxu0 0.0
    %686 = vmatpush2.msra.mxu0 0.0
    %687 = vmatprep.subr.mxu0 0.0
    %688 = vmatpush2.msra.mxu0 0.0
    %689 = vmatprep.subr.mxu0 0.0
    %690 = vmatpush2.msra.mxu0 0.0
    %691 = vmatprep.mubr.f32.mxu0 0.0
    %692 = vmatmul.mubr.f32.gmra.mxu0 %v197
    %v693 = vpop.f32.mrf.mxu0
    %v694 = vadd.f32 %v623, %v693
    %v695 = vpop.f32.mrf.mxu0
    %696 = vmatprep.mubr.f32.mxu0 0.0
    %697 = vmatmul.mubr.f32.gmra.mxu0 %v200
    %v698 = vpop.f32.mrf.mxu0
    %v699 = vadd.f32 %v624, %v698
    %v700 = vpop.f32.mrf.mxu0
    %701 = vmatprep.mubr.f32.mxu0 0.0
    %702 = vmatmul.mubr.f32.gmra.mxu0 %v203
    %v703 = vpop.f32.mrf.mxu0
    %v704 = vadd.f32 %v625, %v703
    %v705 = vpop.f32.mrf.mxu0
    %706 = vmatprep.mubr.f32.mxu0 0.0
    %707 = vmatmul.mubr.f32.gmra.mxu0 %v206
    %v708 = vpop.f32.mrf.mxu0
    %v709 = vadd.f32 %v626, %v708
    %v710 = vpop.f32.mrf.mxu0
    %711 = vdwg.mxu0
    %s712 = scalar_lea.vmem %s3, 2
    %v713 = vld [vmem:[%s712] sm:$0x1]
    %v715 = vlaneseq
    %v716 = vshrl.u32 %v715, 7
    %v717 = vsub.s32 0, %v716
    %v718 = vrot.slane %v713, %v717
    %v720 = vadd.f32 %v694, %v718
    %v721 = vadd.f32 %v699, %v718
    %v722 = vadd.f32 %v704, %v718
    %v723 = vadd.f32 %v709, %v718
    %v724 = vmax.f32 %v720, 0.0
    %v725 = vmax.f32 %v721, 0.0
    %v726 = vmax.f32 %v722, 0.0
    %v727 = vmax.f32 %v723, 0.0
    %728 = vst [vmem:[#allocation10] sm:$0xff] %v724
    %729 = vst [vmem:[#allocation10 + $0x8] sm:$0xff] %v725
    %730 = vst [vmem:[#allocation10 + $0x10] sm:$0xff] %v726
    %731 = vst [vmem:[#allocation10 + $0x18] sm:$0xff] %v727
    // Predicated region
    $region38: #{tpu_custom_call.1} parent=1 // pred_check
      _
    $region39: #{tpu_custom_call.1} parent=1 // pred_check_branch
      %733 = sbr.rel (0) target = $region41
    $region40: #{tpu_custom_call.1} parent=1 // pred_region
      %s735 = ssub.s32 512, 512
      %736 = vsyncadd [#allocation4], %s735
      %s737 = sshll.u32 [#allocation10], 4
      %s738 = int_to_ptr.vmem [resolvable:$true] %s737
      %743 = dma.vmem_to_hbm [thread:$0]  %s738, 512, %s5, [#allocation4], 128, 128, 8
    $region41: #{tpu_custom_call.1} parent=1 // pred_fallthru
      _
    // Predicated region
    $region42: #{tpu_custom_call.1} parent=1 // pred_check
      _
    $region43: #{tpu_custom_call.1} parent=1 // pred_check_branch
      %745 = sbr.rel (0) target = $region45
    $region44: #{tpu_custom_call.1} parent=1 // pred_region
      %746 = dma.done [#allocation4], 512
    $region45: #{tpu_custom_call.1} parent=1 // pred_fallthru
      _
    %747 = vsyncpa [#allocation3], 1
    %748 = vsyncpa [#allocation7], 1
    %749 = vsyncpa [#allocation4], 1
    %750 = vsyncpa [#allocation5], 1

</llo_original>
